<compile_context>
chip_gen: v7x
topology: tpu7x:2x2x1
jax: 0.10.0
libtpu: 0.0.40
codegen_flags: <defaults>
</compile_context>

<pallas_src>
import functools

import jax
import jax.numpy as jnp
from jax.experimental import pallas as pl
from jax.experimental.pallas import tpu as pltpu


def _round_up(v, m):
    return ((v + m - 1) // m) * m


def _vmem_capacity_bytes():
    """Physical VMEM of the local TPU; conservative 64 MiB fallback (v7x)."""
    try:
        return int(pltpu.get_tpu_info().vmem_capacity_bytes)
    except Exception:
        return 64 * 1024 * 1024


def _select_tiles(B, T, Dp, Hp, budget_bytes):
    """Pick (Bb, tc): batch-block and time-block sizes under a VMEM budget."""
    B8 = _round_up(max(B, 1), 8)
    T8 = _round_up(max(T, 1), 8)
    # Small time block: amortizes grid-step overhead while keeping the
    # unrolled serial loop's live ranges bounded (review: cap at 8-16).
    tc = min(16, T8)
    # Batch block: multiple of 8; prefer >= 2 blocks so the "parallel" grid
    # axis can be split across TensorCores (v7x megacore).
    Bb = B8 if B8 <= 8 else min(128, _round_up(B8 // 2, 8))

    def usage(bb, tcc):
        io_blocks = 2 * bb * tcc * Dp + 2 * bb * tcc * Hp      # double-buffered
        weights = 2 * (Dp * Hp + Hp * Hp + Hp)                 # double-buffered
        scratch = bb * Hp + tcc * bb * Hp                      # h carry + stage
        return 4 * (io_blocks + weights + scratch)

    while usage(Bb, tc) > budget_bytes and tc > 8:
        tc -= 8
    while usage(Bb, tc) > budget_bytes and Bb > 8:
        Bb = _round_up(Bb // 2, 8)
    return Bb, tc


def _rnn_fused_kernel(x_ref, wxh_ref, whh_ref, bh_ref, out_ref,
                      h_scratch, stage_buf, *, tc):
    """One (batch-block, time-block) step of the fused RNN forward.

    x_ref:     (Bb, tc, Dp)   input block
    wxh_ref:   (Dp, Hp)       W_xh^T   (constant index map -> stays resident)
    whh_ref:   (Hp, Hp)       W_hh^T   (constant index map -> stays resident)
    bh_ref:    (1, Hp)        bias
    out_ref:   (Bb, tc, Hp)   hidden states for this block
    h_scratch: (Bb, Hp) f32   hidden state carried across time blocks
    stage_buf: (tc, Bb, Hp) f32  projection/output staging (dense per-t tiles)
    """
    @pl.when(pl.program_id(1) == 0)
    def _():
        h_scratch[...] = jnp.zeros_like(h_scratch)

    Bb, _, Dp = x_ref.shape
    Hp = out_ref.shape[2]

    # ---- h-independent input projection for all tc timesteps: one MXU matmul.
    xm = x_ref[...].reshape(Bb * tc, Dp)
    proj = jnp.dot(xm, wxh_ref[...], preferred_element_type=jnp.float32)
    proj = proj + bh_ref[...]
    # Stage as (tc, Bb, Hp) so every per-timestep access below is a dense tile.
    stage_buf[...] = jnp.transpose(proj.reshape(Bb, tc, Hp), (1, 0, 2))

    # ---- Serial recurrence over the tc timesteps of this block.
    # TODO(synk): hold W_hh stationary in the MXU via matmul_push_rhs /
    # matmul_acc_lhs for small-batch inference instead of jnp.dot per step.
    h = h_scratch[...]
    w = whh_ref[...]
    for t in range(tc):                       # tc <= 16: bounded static unroll
        pre = stage_buf[t] + jnp.dot(h, w, preferred_element_type=jnp.float32)
        h = jnp.maximum(pre, 0.0)
        stage_buf[t] = h                      # dense (Bb, Hp) store
    h_scratch[...] = h

    # One dense (Bb, tc, Hp) store per block; the (tc,Bb)<->(Bb,tc) shuffle is
    # XLU work, which has slack against the MXU / store slots.
    out_ref[...] = jnp.transpose(stage_buf[...], (1, 0, 2)).astype(out_ref.dtype)


def rnn_forward(x, w_xh, w_hh, b_h):
    """x: (B, T, D) f32; w_xh: (H, D); w_hh: (H, H); b_h: (H,). Returns (B, T, H)."""
    B, T, D = x.shape
    H = w_xh.shape[0]

    # Lane-align D and H (zero-padded weight columns / hidden units stay
    # exactly zero through the recurrence, so padding never leaks into the
    # real outputs).
    Dp = _round_up(D, 128)
    Hp = _round_up(H, 128)

    vmem_cap = _vmem_capacity_bytes()
    budget = int(vmem_cap * 0.45)          # block-sizing budget with headroom
    vmem_limit = int(vmem_cap * 0.75)      # ~96 MiB on v5e/v6e, ~48 MiB on v7x

    Bb, tc = _select_tiles(B, T, Dp, Hp, budget)
    Bp = _round_up(B, Bb)
    Tp = _round_up(T, tc)

    x_p = jnp.zeros((Bp, Tp, Dp), x.dtype).at[:B, :T, :D].set(x)
    wxh_t = jnp.zeros((Dp, Hp), jnp.float32).at[:D, :H].set(
        jnp.transpose(w_xh).astype(jnp.float32))
    whh_t = jnp.zeros((Hp, Hp), jnp.float32).at[:H, :H].set(
        jnp.transpose(w_hh).astype(jnp.float32))
    bh2 = jnp.zeros((1, Hp), jnp.float32).at[0, :H].set(b_h.astype(jnp.float32))

    out = pl.pallas_call(
        functools.partial(_rnn_fused_kernel, tc=tc),
        out_shape=jax.ShapeDtypeStruct((Bp, Tp, Hp), x.dtype),
        grid=(Bp // Bb, Tp // tc),
        in_specs=[
            pl.BlockSpec((Bb, tc, Dp), lambda b, t: (b, t, 0)),
            pl.BlockSpec((Dp, Hp), lambda b, t: (0, 0)),
            pl.BlockSpec((Hp, Hp), lambda b, t: (0, 0)),
            pl.BlockSpec((1, Hp), lambda b, t: (0, 0)),
        ],
        out_specs=pl.BlockSpec((Bb, tc, Hp), lambda b, t: (b, t, 0)),
        scratch_shapes=[
            pltpu.VMEM((Bb, Hp), jnp.float32),       # hidden-state carry
            pltpu.VMEM((tc, Bb, Hp), jnp.float32),   # projection/output staging
        ],
        compiler_params=pltpu.CompilerParams(
            # Batch blocks are independent ("parallel", megacore-shardable);
            # the time axis carries h in VMEM scratch and MUST stay sequential.
            dimension_semantics=("parallel", "arbitrary"),
            vmem_limit_bytes=vmem_limit,
        ),
    )(x_p, wxh_t, whh_t, bh2)

    return out[:B, :T, :H]


def rnn_reference(x, w_xh, w_hh, b_h):
    """Pure-JAX reference matching the PyTorch forward."""
    B, T, D = x.shape
    H = w_xh.shape[0]
    h = jnp.zeros((B, H), dtype=jnp.float32)
    outs = []
    for t in range(T):
        h = jax.nn.relu(x[:, t, :] @ w_xh.T + h @ w_hh.T + b_h)
        outs.append(h)
    return jnp.stack(outs, axis=1)


if __name__ == "__main__":
    # Small deterministic setup: batch=4, seq=8, input=16, hidden=32
    B, T, D, H = 4, 8, 16, 32
    key = jax.random.PRNGKey(0)
    k_x, k_wxh, k_whh, k_b = jax.random.split(key, 4)

    x = jax.random.normal(k_x, (B, T, D), dtype=jnp.float32)
    bound_xh = 1.0 / (D ** 0.5)
    bound_hh = 1.0 / (H ** 0.5)
    w_xh = jax.random.uniform(k_wxh, (H, D), minval=-bound_xh, maxval=bound_xh,
                              dtype=jnp.float32)
    w_hh = jax.random.uniform(k_whh, (H, H), minval=-bound_hh, maxval=bound_hh,
                              dtype=jnp.float32)
    # Non-zero bias to exercise the folded-bias path (module inits it to zeros).
    b_h = 0.1 * jax.random.normal(k_b, (H,), dtype=jnp.float32)

    out = rnn_forward(x, w_xh, w_hh, b_h)
    out = jax.block_until_ready(out)

    ref = rnn_reference(x, w_xh, w_hh, b_h)
    assert out.shape == (B, T, H)
    assert jnp.allclose(out, ref, atol=1e-5, rtol=1e-5), "mismatch vs reference"

    print("KERNEL_OK")
</pallas_src>

<mosaic_0001>
module attributes {stable_mosaic.version = 11 : i64} {
  func.func @_rnn_fused_kernel(%arg0: i32, %arg1: i32, %arg2: memref<8x8x128xf32, #tpu.memory_space<vmem>>, %arg3: memref<128x128xf32, #tpu.memory_space<vmem>>, %arg4: memref<128x128xf32, #tpu.memory_space<vmem>>, %arg5: memref<1x128xf32, #tpu.memory_space<vmem>>, %arg6: memref<8x8x128xf32, #tpu.memory_space<vmem>>, %arg7: memref<8x128xf32, #tpu.memory_space<vmem>>, %arg8: memref<8x8x128xf32, #tpu.memory_space<vmem>>) attributes {dimension_semantics = [#tpu.dimension_semantics<parallel>, #tpu.dimension_semantics<arbitrary>], iteration_bounds = array<i64: 1, 1>, scalar_prefetch = 0 : i64, scratch_operands = 2 : i64, tpu.core_type = #tpu.core_type<tc>, window_params = [{transform_indices = @transform_0, window_bounds = array<i64: 8, 8, 128>}, {pipeline_mode = #tpu.pipeline_mode<synchronous>, transform_indices = @transform_1, window_bounds = array<i64: 128, 128>}, {pipeline_mode = #tpu.pipeline_mode<synchronous>, transform_indices = @transform_2, window_bounds = array<i64: 128, 128>}, {pipeline_mode = #tpu.pipeline_mode<synchronous>, transform_indices = @transform_3, window_bounds = array<i64: 1, 128>}, {transform_indices = @transform_4, window_bounds = array<i64: 8, 8, 128>}]} {
    %c0_i32 = arith.constant 0 : i32
    %0 = arith.cmpi eq, %arg1, %c0_i32 : i32
    %1 = arith.extui %0 : i1 to i32
    %c0_i32_0 = arith.constant 0 : i32
    %2 = arith.cmpi ne, %1, %c0_i32_0 : i32
    scf.if %2 {
      %cst_79 = arith.constant 0.000000e+00 : f32
      %91 = vector.broadcast %cst_79 : f32 to vector<8x128xf32>
      %c0_80 = arith.constant 0 : index
      %c0_81 = arith.constant 0 : index
      %92 = vector.load %arg7[%c0_80, %c0_81] : memref<8x128xf32, #tpu.memory_space<vmem>>, vector<8x128xf32>
      tpu.vector_store %arg7[%c0_80, %c0_81], %91 {strides = array<i32>} : memref<8x128xf32, #tpu.memory_space<vmem>>, vector<8x128xf32>,
    } else {
    }
    %c0 = arith.constant 0 : index
    %c0_1 = arith.constant 0 : index
    %c0_2 = arith.constant 0 : index
    %3 = vector.load %arg2[%c0, %c0_1, %c0_2] : memref<8x8x128xf32, #tpu.memory_space<vmem>>, vector<8x8x128xf32>
    %4 = vector.shape_cast %3 : vector<8x8x128xf32> to vector<64x128xf32>
    %c0_3 = arith.constant 0 : index
    %c0_4 = arith.constant 0 : index
    %5 = vector.load %arg3[%c0_3, %c0_4] : memref<128x128xf32, #tpu.memory_space<vmem>>, vector<128x128xf32>
    %cst = arith.constant dense<0.000000e+00> : vector<64x128xf32>
    %6 = tpu.matmul %4, %5, %cst {dimension_numbers = #tpu.dot_dimension_numbers<[1], [0], [0], [1], [0, 0, 1, 1], [], []>} : vector<64x128xf32>, vector<128x128xf32>, vector<64x128xf32> -> vector<64x128xf32>
    %c0_5 = arith.constant 0 : index
    %c0_6 = arith.constant 0 : index
    %7 = vector.load %arg5[%c0_5, %c0_6] : memref<1x128xf32, #tpu.memory_space<vmem>>, vector<1x128xf32>
    %8 = vector.broadcast %7 : vector<1x128xf32> to vector<64x128xf32>
    %9 = arith.addf %6, %8 : vector<64x128xf32>
    %10 = vector.shape_cast %9 : vector<64x128xf32> to vector<8x8x128xf32>
    %11 = tpu.transpose %10, [1, 0, 2] : vector<8x8x128xf32> -> vector<8x8x128xf32>
    %c0_7 = arith.constant 0 : index
    %c0_8 = arith.constant 0 : index
    %c0_9 = arith.constant 0 : index
    %12 = vector.load %arg8[%c0_7, %c0_8, %c0_9] : memref<8x8x128xf32, #tpu.memory_space<vmem>>, vector<8x8x128xf32>
    tpu.vector_store %arg8[%c0_7, %c0_8, %c0_9], %11 {strides = array<i32>} : memref<8x8x128xf32, #tpu.memory_space<vmem>>, vector<8x8x128xf32>,
    %c0_10 = arith.constant 0 : index
    %c0_11 = arith.constant 0 : index
    %13 = vector.load %arg7[%c0_10, %c0_11] : memref<8x128xf32, #tpu.memory_space<vmem>>, vector<8x128xf32>
    %c0_12 = arith.constant 0 : index
    %c0_13 = arith.constant 0 : index
    %14 = vector.load %arg4[%c0_12, %c0_13] : memref<128x128xf32, #tpu.memory_space<vmem>>, vector<128x128xf32>
    %c0_14 = arith.constant 0 : index
    %c0_15 = arith.constant 0 : index
    %c0_16 = arith.constant 0 : index
    %15 = vector.load %arg8[%c0_14, %c0_15, %c0_16] : memref<8x8x128xf32, #tpu.memory_space<vmem>>, vector<1x8x128xf32>
    %16 = vector.shape_cast %15 : vector<1x8x128xf32> to vector<8x128xf32>
    %cst_17 = arith.constant dense<0.000000e+00> : vector<8x128xf32>
    %17 = tpu.matmul %13, %14, %cst_17 {dimension_numbers = #tpu.dot_dimension_numbers<[1], [0], [0], [1], [0, 0, 1, 1], [], []>} : vector<8x128xf32>, vector<128x128xf32>, vector<8x128xf32> -> vector<8x128xf32>
    %18 = arith.addf %16, %17 : vector<8x128xf32>
    %cst_18 = arith.constant 0.000000e+00 : f32
    %19 = vector.broadcast %cst_18 : f32 to vector<8x128xf32>
    %20 = arith.maximumf %18, %19 : vector<8x128xf32>
    %c0_19 = arith.constant 0 : index
    %c0_20 = arith.constant 0 : index
    %c0_21 = arith.constant 0 : index
    %21 = vector.load %arg8[%c0_19, %c0_20, %c0_21] : memref<8x8x128xf32, #tpu.memory_space<vmem>>, vector<1x8x128xf32>
    %22 = vector.shape_cast %21 : vector<1x8x128xf32> to vector<8x128xf32>
    %23 = vector.shape_cast %20 : vector<8x128xf32> to vector<1x8x128xf32>
    tpu.vector_store %arg8[%c0_19, %c0_20, %c0_21], %23 {strides = array<i32>} : memref<8x8x128xf32, #tpu.memory_space<vmem>>, vector<1x8x128xf32>,
    %c1 = arith.constant 1 : index
    %c0_22 = arith.constant 0 : index
    %c0_23 = arith.constant 0 : index
    %24 = vector.load %arg8[%c1, %c0_22, %c0_23] : memref<8x8x128xf32, #tpu.memory_space<vmem>>, vector<1x8x128xf32>
    %25 = vector.shape_cast %24 : vector<1x8x128xf32> to vector<8x128xf32>
    %cst_24 = arith.constant dense<0.000000e+00> : vector<8x128xf32>
    %26 = tpu.matmul %20, %14, %cst_24 {dimension_numbers = #tpu.dot_dimension_numbers<[1], [0], [0], [1], [0, 0, 1, 1], [], []>} : vector<8x128xf32>, vector<128x128xf32>, vector<8x128xf32> -> vector<8x128xf32>
    %27 = arith.addf %25, %26 : vector<8x128xf32>
    %cst_25 = arith.constant 0.000000e+00 : f32
    %28 = vector.broadcast %cst_25 : f32 to vector<8x128xf32>
    %29 = arith.maximumf %27, %28 : vector<8x128xf32>
    %c1_26 = arith.constant 1 : index
    %c0_27 = arith.constant 0 : index
    %c0_28 = arith.constant 0 : index
    %30 = vector.load %arg8[%c1_26, %c0_27, %c0_28] : memref<8x8x128xf32, #tpu.memory_space<vmem>>, vector<1x8x128xf32>
    %31 = vector.shape_cast %30 : vector<1x8x128xf32> to vector<8x128xf32>
    %32 = vector.shape_cast %29 : vector<8x128xf32> to vector<1x8x128xf32>
    tpu.vector_store %arg8[%c1_26, %c0_27, %c0_28], %32 {strides = array<i32>} : memref<8x8x128xf32, #tpu.memory_space<vmem>>, vector<1x8x128xf32>,
    %c2 = arith.constant 2 : index
    %c0_29 = arith.constant 0 : index
    %c0_30 = arith.constant 0 : index
    %33 = vector.load %arg8[%c2, %c0_29, %c0_30] : memref<8x8x128xf32, #tpu.memory_space<vmem>>, vector<1x8x128xf32>
    %34 = vector.shape_cast %33 : vector<1x8x128xf32> to vector<8x128xf32>
    %cst_31 = arith.constant dense<0.000000e+00> : vector<8x128xf32>
    %35 = tpu.matmul %29, %14, %cst_31 {dimension_numbers = #tpu.dot_dimension_numbers<[1], [0], [0], [1], [0, 0, 1, 1], [], []>} : vector<8x128xf32>, vector<128x128xf32>, vector<8x128xf32> -> vector<8x128xf32>
    %36 = arith.addf %34, %35 : vector<8x128xf32>
    %cst_32 = arith.constant 0.000000e+00 : f32
    %37 = vector.broadcast %cst_32 : f32 to vector<8x128xf32>
    %38 = arith.maximumf %36, %37 : vector<8x128xf32>
    %c2_33 = arith.constant 2 : index
    %c0_34 = arith.constant 0 : index
    %c0_35 = arith.constant 0 : index
    %39 = vector.load %arg8[%c2_33, %c0_34, %c0_35] : memref<8x8x128xf32, #tpu.memory_space<vmem>>, vector<1x8x128xf32>
    %40 = vector.shape_cast %39 : vector<1x8x128xf32> to vector<8x128xf32>
    %41 = vector.shape_cast %38 : vector<8x128xf32> to vector<1x8x128xf32>
    tpu.vector_store %arg8[%c2_33, %c0_34, %c0_35], %41 {strides = array<i32>} : memref<8x8x128xf32, #tpu.memory_space<vmem>>, vector<1x8x128xf32>,
    %c3 = arith.constant 3 : index
    %c0_36 = arith.constant 0 : index
    %c0_37 = arith.constant 0 : index
    %42 = vector.load %arg8[%c3, %c0_36, %c0_37] : memref<8x8x128xf32, #tpu.memory_space<vmem>>, vector<1x8x128xf32>
    %43 = vector.shape_cast %42 : vector<1x8x128xf32> to vector<8x128xf32>
    %cst_38 = arith.constant dense<0.000000e+00> : vector<8x128xf32>
    %44 = tpu.matmul %38, %14, %cst_38 {dimension_numbers = #tpu.dot_dimension_numbers<[1], [0], [0], [1], [0, 0, 1, 1], [], []>} : vector<8x128xf32>, vector<128x128xf32>, vector<8x128xf32> -> vector<8x128xf32>
    %45 = arith.addf %43, %44 : vector<8x128xf32>
    %cst_39 = arith.constant 0.000000e+00 : f32
    %46 = vector.broadcast %cst_39 : f32 to vector<8x128xf32>
    %47 = arith.maximumf %45, %46 : vector<8x128xf32>
    %c3_40 = arith.constant 3 : index
    %c0_41 = arith.constant 0 : index
    %c0_42 = arith.constant 0 : index
    %48 = vector.load %arg8[%c3_40, %c0_41, %c0_42] : memref<8x8x128xf32, #tpu.memory_space<vmem>>, vector<1x8x128xf32>
    %49 = vector.shape_cast %48 : vector<1x8x128xf32> to vector<8x128xf32>
    %50 = vector.shape_cast %47 : vector<8x128xf32> to vector<1x8x128xf32>
    tpu.vector_store %arg8[%c3_40, %c0_41, %c0_42], %50 {strides = array<i32>} : memref<8x8x128xf32, #tpu.memory_space<vmem>>, vector<1x8x128xf32>,
    %c4 = arith.constant 4 : index
    %c0_43 = arith.constant 0 : index
    %c0_44 = arith.constant 0 : index
    %51 = vector.load %arg8[%c4, %c0_43, %c0_44] : memref<8x8x128xf32, #tpu.memory_space<vmem>>, vector<1x8x128xf32>
    %52 = vector.shape_cast %51 : vector<1x8x128xf32> to vector<8x128xf32>
    %cst_45 = arith.constant dense<0.000000e+00> : vector<8x128xf32>
    %53 = tpu.matmul %47, %14, %cst_45 {dimension_numbers = #tpu.dot_dimension_numbers<[1], [0], [0], [1], [0, 0, 1, 1], [], []>} : vector<8x128xf32>, vector<128x128xf32>, vector<8x128xf32> -> vector<8x128xf32>
    %54 = arith.addf %52, %53 : vector<8x128xf32>
    %cst_46 = arith.constant 0.000000e+00 : f32
    %55 = vector.broadcast %cst_46 : f32 to vector<8x128xf32>
    %56 = arith.maximumf %54, %55 : vector<8x128xf32>
    %c4_47 = arith.constant 4 : index
    %c0_48 = arith.constant 0 : index
    %c0_49 = arith.constant 0 : index
    %57 = vector.load %arg8[%c4_47, %c0_48, %c0_49] : memref<8x8x128xf32, #tpu.memory_space<vmem>>, vector<1x8x128xf32>
    %58 = vector.shape_cast %57 : vector<1x8x128xf32> to vector<8x128xf32>
    %59 = vector.shape_cast %56 : vector<8x128xf32> to vector<1x8x128xf32>
    tpu.vector_store %arg8[%c4_47, %c0_48, %c0_49], %59 {strides = array<i32>} : memref<8x8x128xf32, #tpu.memory_space<vmem>>, vector<1x8x128xf32>,
    %c5 = arith.constant 5 : index
    %c0_50 = arith.constant 0 : index
    %c0_51 = arith.constant 0 : index
    %60 = vector.load %arg8[%c5, %c0_50, %c0_51] : memref<8x8x128xf32, #tpu.memory_space<vmem>>, vector<1x8x128xf32>
    %61 = vector.shape_cast %60 : vector<1x8x128xf32> to vector<8x128xf32>
    %cst_52 = arith.constant dense<0.000000e+00> : vector<8x128xf32>
    %62 = tpu.matmul %56, %14, %cst_52 {dimension_numbers = #tpu.dot_dimension_numbers<[1], [0], [0], [1], [0, 0, 1, 1], [], []>} : vector<8x128xf32>, vector<128x128xf32>, vector<8x128xf32> -> vector<8x128xf32>
    %63 = arith.addf %61, %62 : vector<8x128xf32>
    %cst_53 = arith.constant 0.000000e+00 : f32
    %64 = vector.broadcast %cst_53 : f32 to vector<8x128xf32>
    %65 = arith.maximumf %63, %64 : vector<8x128xf32>
    %c5_54 = arith.constant 5 : index
    %c0_55 = arith.constant 0 : index
    %c0_56 = arith.constant 0 : index
    %66 = vector.load %arg8[%c5_54, %c0_55, %c0_56] : memref<8x8x128xf32, #tpu.memory_space<vmem>>, vector<1x8x128xf32>
    %67 = vector.shape_cast %66 : vector<1x8x128xf32> to vector<8x128xf32>
    %68 = vector.shape_cast %65 : vector<8x128xf32> to vector<1x8x128xf32>
    tpu.vector_store %arg8[%c5_54, %c0_55, %c0_56], %68 {strides = array<i32>} : memref<8x8x128xf32, #tpu.memory_space<vmem>>, vector<1x8x128xf32>,
    %c6 = arith.constant 6 : index
    %c0_57 = arith.constant 0 : index
    %c0_58 = arith.constant 0 : index
    %69 = vector.load %arg8[%c6, %c0_57, %c0_58] : memref<8x8x128xf32, #tpu.memory_space<vmem>>, vector<1x8x128xf32>
    %70 = vector.shape_cast %69 : vector<1x8x128xf32> to vector<8x128xf32>
    %cst_59 = arith.constant dense<0.000000e+00> : vector<8x128xf32>
    %71 = tpu.matmul %65, %14, %cst_59 {dimension_numbers = #tpu.dot_dimension_numbers<[1], [0], [0], [1], [0, 0, 1, 1], [], []>} : vector<8x128xf32>, vector<128x128xf32>, vector<8x128xf32> -> vector<8x128xf32>
    %72 = arith.addf %70, %71 : vector<8x128xf32>
    %cst_60 = arith.constant 0.000000e+00 : f32
    %73 = vector.broadcast %cst_60 : f32 to vector<8x128xf32>
    %74 = arith.maximumf %72, %73 : vector<8x128xf32>
    %c6_61 = arith.constant 6 : index
    %c0_62 = arith.constant 0 : index
    %c0_63 = arith.constant 0 : index
    %75 = vector.load %arg8[%c6_61, %c0_62, %c0_63] : memref<8x8x128xf32, #tpu.memory_space<vmem>>, vector<1x8x128xf32>
    %76 = vector.shape_cast %75 : vector<1x8x128xf32> to vector<8x128xf32>
    %77 = vector.shape_cast %74 : vector<8x128xf32> to vector<1x8x128xf32>
    tpu.vector_store %arg8[%c6_61, %c0_62, %c0_63], %77 {strides = array<i32>} : memref<8x8x128xf32, #tpu.memory_space<vmem>>, vector<1x8x128xf32>,
    %c7 = arith.constant 7 : index
    %c0_64 = arith.constant 0 : index
    %c0_65 = arith.constant 0 : index
    %78 = vector.load %arg8[%c7, %c0_64, %c0_65] : memref<8x8x128xf32, #tpu.memory_space<vmem>>, vector<1x8x128xf32>
    %79 = vector.shape_cast %78 : vector<1x8x128xf32> to vector<8x128xf32>
    %cst_66 = arith.constant dense<0.000000e+00> : vector<8x128xf32>
    %80 = tpu.matmul %74, %14, %cst_66 {dimension_numbers = #tpu.dot_dimension_numbers<[1], [0], [0], [1], [0, 0, 1, 1], [], []>} : vector<8x128xf32>, vector<128x128xf32>, vector<8x128xf32> -> vector<8x128xf32>
    %81 = arith.addf %79, %80 : vector<8x128xf32>
    %cst_67 = arith.constant 0.000000e+00 : f32
    %82 = vector.broadcast %cst_67 : f32 to vector<8x128xf32>
    %83 = arith.maximumf %81, %82 : vector<8x128xf32>
    %c7_68 = arith.constant 7 : index
    %c0_69 = arith.constant 0 : index
    %c0_70 = arith.constant 0 : index
    %84 = vector.load %arg8[%c7_68, %c0_69, %c0_70] : memref<8x8x128xf32, #tpu.memory_space<vmem>>, vector<1x8x128xf32>
    %85 = vector.shape_cast %84 : vector<1x8x128xf32> to vector<8x128xf32>
    %86 = vector.shape_cast %83 : vector<8x128xf32> to vector<1x8x128xf32>
    tpu.vector_store %arg8[%c7_68, %c0_69, %c0_70], %86 {strides = array<i32>} : memref<8x8x128xf32, #tpu.memory_space<vmem>>, vector<1x8x128xf32>,
    %c0_71 = arith.constant 0 : index
    %c0_72 = arith.constant 0 : index
    %87 = vector.load %arg7[%c0_71, %c0_72] : memref<8x128xf32, #tpu.memory_space<vmem>>, vector<8x128xf32>
    tpu.vector_store %arg7[%c0_71, %c0_72], %83 {strides = array<i32>} : memref<8x128xf32, #tpu.memory_space<vmem>>, vector<8x128xf32>,
    %c0_73 = arith.constant 0 : index
    %c0_74 = arith.constant 0 : index
    %c0_75 = arith.constant 0 : index
    %88 = vector.load %arg8[%c0_73, %c0_74, %c0_75] : memref<8x8x128xf32, #tpu.memory_space<vmem>>, vector<8x8x128xf32>
    %89 = tpu.transpose %88, [1, 0, 2] : vector<8x8x128xf32> -> vector<8x8x128xf32>
    %c0_76 = arith.constant 0 : index
    %c0_77 = arith.constant 0 : index
    %c0_78 = arith.constant 0 : index
    %90 = vector.load %arg6[%c0_76, %c0_77, %c0_78] : memref<8x8x128xf32, #tpu.memory_space<vmem>>, vector<8x8x128xf32>
    tpu.vector_store %arg6[%c0_76, %c0_77, %c0_78], %89 {strides = array<i32>} : memref<8x8x128xf32, #tpu.memory_space<vmem>>, vector<8x8x128xf32>,
    return
  }
  func.func @transform_0(%arg0: i32, %arg1: i32) -> (i32, i32, i32) {
    %c0_i32 = arith.constant 0 : i32
    %c0_i32_0 = arith.constant 0 : i32
    return %arg0, %arg1, %c0_i32 : i32, i32, i32
  }
  func.func @transform_1(%arg0: i32, %arg1: i32) -> (i32, i32) {
    %c0_i32 = arith.constant 0 : i32
    %c0_i32_0 = arith.constant 0 : i32
    %c0_i32_1 = arith.constant 0 : i32
    return %c0_i32, %c0_i32_0 : i32, i32
  }
  func.func @transform_2(%arg0: i32, %arg1: i32) -> (i32, i32) {
    %c0_i32 = arith.constant 0 : i32
    %c0_i32_0 = arith.constant 0 : i32
    %c0_i32_1 = arith.constant 0 : i32
    return %c0_i32, %c0_i32_0 : i32, i32
  }
  func.func @transform_3(%arg0: i32, %arg1: i32) -> (i32, i32) {
    %c0_i32 = arith.constant 0 : i32
    %c0_i32_0 = arith.constant 0 : i32
    %c0_i32_1 = arith.constant 0 : i32
    return %c0_i32, %c0_i32_0 : i32, i32
  }
  func.func @transform_4(%arg0: i32, %arg1: i32) -> (i32, i32, i32) {
    %c0_i32 = arith.constant 0 : i32
    %c0_i32_0 = arith.constant 0 : i32
    return %arg0, %arg1, %c0_i32 : i32, i32, i32
  }
}

</mosaic_0001>

<llo_original>
// kernel: tpu_custom_call.1
$region0: #{tpu_custom_call.1}
  #allocation0 [shape = 'u32[]', space=smem, size = 0x4, offset = 0x4, fixed_abs, tag = 'smem constant byte address 0x4 - core index']
  #allocation1 [shape = 'u32[144,128]{1,0:T(1,128)}', space=vmem, size = 0x12000, scoped, tag = 'internal scratch']
  #allocation2 [shape = 'f32[8,128]{1,0:T(8,128)}', space=vmem, size = 0x1000, scoped, tag = 'scratch operand']
  #allocation3 [shape = 'f32[8,8,128]{2,1,0:T(8,128)}', space=vmem, size = 0x8000, scoped, tag = 'scratch operand']
  %s0 = inlined_call_operand.hbm [shape: f32[8,8,128], index: 0, kind: input, shape index: {}]
  %s1 = inlined_call_operand.hbm [shape: f32[128,128], index: 1, kind: input, shape index: {}]
  %s2 = inlined_call_operand.hbm [shape: f32[128,128], index: 2, kind: input, shape index: {}]
  %s3 = inlined_call_operand.vmem [shape: f32[1,128], index: 3, kind: input, shape index: {}]
  %s4 = inlined_call_operand.hbm [shape: f32[8,8,128], index: 4, kind: output, shape index: {}]
  %s5 = sld [smem:[#allocation0]]
  $region42: #{tpu_custom_call.1} parent=0
    _
  %s7 = ssub.s32 1, %s5
  %s8 = scalar_select 0, %s7, %s5
  $region1: #{tpu_custom_call.1} parent=0
    #allocation4 [shape = 'u8[32768]{0}', space=vmem, size = 0x8000, scoped, tag = 'input window, operand 0, single buffered']
    #allocation5 [shape = 's32[1]{0}', space=sflag, size = 0x4, scoped, tag = 'scoped memory for tpu_custom_call.1']
    #allocation6 [shape = 's32[1]{0}', space=sflag, size = 0x4, scoped, tag = 'scoped memory for tpu_custom_call.1']
    #allocation7 [shape = 'u8[65536]{0}', space=vmem, size = 0x10000, scoped, tag = 'input window, operand 1, single buffered']
    #allocation8 [shape = 's32[1]{0}', space=sflag, size = 0x4, scoped, tag = 'scoped memory for tpu_custom_call.1']
    #allocation9 [shape = 'u8[65536]{0}', space=vmem, size = 0x10000, scoped, tag = 'input window, operand 2, single buffered']
    #allocation10 [shape = 'u8[32768]{0}', space=vmem, size = 0x8000, scoped, tag = 'output window, operand 0, single buffered']
    %9 = vsyncpa [#allocation5], 0
    %10 = vsyncpa [#allocation8], 0
    %11 = vsyncpa [#allocation6], 0
    // Predicated region
    $region2: #{tpu_custom_call.1} parent=1 // pred_check
      _
    $region3: #{tpu_custom_call.1} parent=1 // pred_check_branch
      %13 = sbr.rel (0) target = $region5
    $region4: #{tpu_custom_call.1} parent=1 // pred_region
      %s15 = ssub.s32 1024, 1024
      %16 = vsyncadd [#allocation5], %s15
      %s17 = sshll.u32 [#allocation4], 4
      %s18 = int_to_ptr.vmem [resolvable:$true] %s17
      %23 = dma.hbm_to_vmem [thread:$0]  %s0, 1024, %s18, [#allocation5], 128, 128, 8
    $region5: #{tpu_custom_call.1} parent=1 // pred_fallthru
      _
    // Predicated region
    $region6: #{tpu_custom_call.1} parent=1 // pred_check
      _
    $region7: #{tpu_custom_call.1} parent=1 // pred_check_branch
      %25 = sbr.rel (0) target = $region9
    $region8: #{tpu_custom_call.1} parent=1 // pred_region
      %s27 = ssub.s32 2048, 2048
      %28 = vsyncadd [#allocation8], %s27
      %s29 = sshll.u32 [#allocation7], 4
      %s30 = int_to_ptr.vmem [resolvable:$true] %s29
      %35 = dma.hbm_to_vmem [thread:$0]  %s1, 2048, %s30, [#allocation8], 128, 128, 8
    $region9: #{tpu_custom_call.1} parent=1 // pred_fallthru
      _
    // Predicated region
    $region10: #{tpu_custom_call.1} parent=1 // pred_check
      _
    $region11: #{tpu_custom_call.1} parent=1 // pred_check_branch
      %37 = sbr.rel (0) target = $region13
    $region12: #{tpu_custom_call.1} parent=1 // pred_region
      %s39 = ssub.s32 2048, 2048
      %40 = vsyncadd [#allocation8], %s39
      %s41 = sshll.u32 [#allocation9], 4
      %s42 = int_to_ptr.vmem [resolvable:$true] %s41
      %47 = dma.hbm_to_vmem [thread:$0]  %s2, 2048, %s42, [#allocation8], 128, 128, 8
    $region13: #{tpu_custom_call.1} parent=1 // pred_fallthru
      _
    // Predicated region
    $region14: #{tpu_custom_call.1} parent=1 // pred_check
      _
    $region15: #{tpu_custom_call.1} parent=1 // pred_check_branch
      %49 = sbr.rel (0) target = $region17
    $region16: #{tpu_custom_call.1} parent=1 // pred_region
      _
    $region17: #{tpu_custom_call.1} parent=1 // pred_fallthru
      _
    // Predicated region
    $region18: #{tpu_custom_call.1} parent=1 // pred_check
      _
    $region19: #{tpu_custom_call.1} parent=1 // pred_check_branch
      %51 = sbr.rel (0) target = $region21
    $region20: #{tpu_custom_call.1} parent=1 // pred_region
      %52 = dma.done [#allocation5], 1024
    $region21: #{tpu_custom_call.1} parent=1 // pred_fallthru
      _
    // Predicated region
    $region22: #{tpu_custom_call.1} parent=1 // pred_check
      _
    $region23: #{tpu_custom_call.1} parent=1 // pred_check_branch
      %54 = sbr.rel (0) target = $region25
    $region24: #{tpu_custom_call.1} parent=1 // pred_region
      %55 = dma.done [#allocation8], 2048
    $region25: #{tpu_custom_call.1} parent=1 // pred_fallthru
      _
    // Predicated region
    $region26: #{tpu_custom_call.1} parent=1 // pred_check
      _
    $region27: #{tpu_custom_call.1} parent=1 // pred_check_branch
      %57 = sbr.rel (0) target = $region29
    $region28: #{tpu_custom_call.1} parent=1 // pred_region
      %58 = dma.done [#allocation8], 2048
    $region29: #{tpu_custom_call.1} parent=1 // pred_fallthru
      _
    %p59 = scmp.eq.s32.totalorder 0, 0
    // Predicated region
    $region30: #{tpu_custom_call.1} parent=1 // pred_check
      %p60 = pneg %p59
    $region31: #{tpu_custom_call.1} parent=1 // pred_check_branch
      %62 = sbr.rel (%p60) target = $region33
    $region32: #{tpu_custom_call.1} parent=1 // pred_region
      %63 = vst [vmem:[#allocation2] sm:$0xff] 0.0
    $region33: #{tpu_custom_call.1} parent=1 // pred_fallthru
      _
    %v64 = vld [vmem:[#allocation4] sm:$0xff]
    %v65 = vld [vmem:[#allocation4 + $0x8] sm:$0xff]
    %v66 = vld [vmem:[#allocation4 + $0x10] sm:$0xff]
    %v67 = vld [vmem:[#allocation4 + $0x18] sm:$0xff]
    %v68 = vld [vmem:[#allocation4 + $0x20] sm:$0xff]
    %v69 = vld [vmem:[#allocation4 + $0x28] sm:$0xff]
    %v70 = vld [vmem:[#allocation4 + $0x30] sm:$0xff]
    %v71 = vld [vmem:[#allocation4 + $0x38] sm:$0xff]
    %v72 = vld [vmem:[#allocation7] sm:$0xff]
    %v73 = vld [vmem:[#allocation7 + $0x8] sm:$0xff]
    %v74 = vld [vmem:[#allocation7 + $0x10] sm:$0xff]
    %v75 = vld [vmem:[#allocation7 + $0x18] sm:$0xff]
    %v76 = vld [vmem:[#allocation7 + $0x20] sm:$0xff]
    %v77 = vld [vmem:[#allocation7 + $0x28] sm:$0xff]
    %v78 = vld [vmem:[#allocation7 + $0x30] sm:$0xff]
    %v79 = vld [vmem:[#allocation7 + $0x38] sm:$0xff]
    %v80 = vld [vmem:[#allocation7 + $0x40] sm:$0xff]
    %v81 = vld [vmem:[#allocation7 + $0x48] sm:$0xff]
    %v82 = vld [vmem:[#allocation7 + $0x50] sm:$0xff]
    %v83 = vld [vmem:[#allocation7 + $0x58] sm:$0xff]
    %v84 = vld [vmem:[#allocation7 + $0x60] sm:$0xff]
    %v85 = vld [vmem:[#allocation7 + $0x68] sm:$0xff]
    %v86 = vld [vmem:[#allocation7 + $0x70] sm:$0xff]
    %v87 = vld [vmem:[#allocation7 + $0x78] sm:$0xff]
    %v88 = vld [vmem:[%s3] sm:$0x1]
    %v90 = vlaneseq
    %v91 = vshrl.u32 %v90, 7
    %v92 = vsub.s32 0, %v91
    %v93 = vrot.slane %v88, %v92
    %95 = vmatprep.subr.mxu0 0.0
    %96 = vmatpush1.msra.mxu0 %v72
    %97 = vmatprep.subr.mxu0 0.0
    %98 = vmatpush1.msra.mxu0 %v73
    %99 = vmatprep.subr.mxu0 0.0
    %100 = vmatpush1.msra.mxu0 %v74
    %101 = vmatprep.subr.mxu0 0.0
    %102 = vmatpush1.msra.mxu0 %v75
    %103 = vmatprep.subr.mxu0 0.0
    %104 = vmatpush1.msra.mxu0 %v76
    %105 = vmatprep.subr.mxu0 0.0
    %106 = vmatpush1.msra.mxu0 %v77
    %107 = vmatprep.subr.mxu0 0.0
    %108 = vmatpush1.msra.mxu0 %v78
    %109 = vmatprep.subr.mxu0 0.0
    %110 = vmatpush1.msra.mxu0 %v79
    %111 = vmatprep.subr.mxu0 0.0
    %112 = vmatpush1.msra.mxu0 %v80
    %113 = vmatprep.subr.mxu0 0.0
    %114 = vmatpush1.msra.mxu0 %v81
    %115 = vmatprep.subr.mxu0 0.0
    %116 = vmatpush1.msra.mxu0 %v82
    %117 = vmatprep.subr.mxu0 0.0
    %118 = vmatpush1.msra.mxu0 %v83
    %119 = vmatprep.subr.mxu0 0.0
    %120 = vmatpush1.msra.mxu0 %v84
    %121 = vmatprep.subr.mxu0 0.0
    %122 = vmatpush1.msra.mxu0 %v85
    %123 = vmatprep.subr.mxu0 0.0
    %124 = vmatpush1.msra.mxu0 %v86
    %125 = vmatprep.subr.mxu0 0.0
    %126 = vmatpush1.msra.mxu0 %v87
    %127 = vmatprep.subr.mxu0 0.0
    %128 = vmatpush1.msra.mxu0 0.0
    %129 = vmatprep.subr.mxu0 0.0
    %130 = vmatpush1.msra.mxu0 0.0
    %131 = vmatprep.subr.mxu0 0.0
    %132 = vmatpush1.msra.mxu0 0.0
    %133 = vmatprep.subr.mxu0 0.0
    %134 = vmatpush1.msra.mxu0 0.0
    %135 = vmatprep.subr.mxu0 0.0
    %136 = vmatpush1.msra.mxu0 0.0
    %137 = vmatprep.subr.mxu0 0.0
    %138 = vmatpush1.msra.mxu0 0.0
    %139 = vmatprep.subr.mxu0 0.0
    %140 = vmatpush1.msra.mxu0 0.0
    %141 = vmatprep.subr.mxu0 0.0
    %142 = vmatpush1.msra.mxu0 0.0
    %143 = vmatprep.subr.mxu0 0.0
    %144 = vmatpush1.msra.mxu0 0.0
    %145 = vmatprep.subr.mxu0 0.0
    %146 = vmatpush1.msra.mxu0 0.0
    %147 = vmatprep.subr.mxu0 0.0
    %148 = vmatpush1.msra.mxu0 0.0
    %149 = vmatprep.subr.mxu0 0.0
    %150 = vmatpush1.msra.mxu0 0.0
    %151 = vmatprep.subr.mxu0 0.0
    %152 = vmatpush1.msra.mxu0 0.0
    %153 = vmatprep.subr.mxu0 0.0
    %154 = vmatpush1.msra.mxu0 0.0
    %155 = vmatprep.subr.mxu0 0.0
    %156 = vmatpush1.msra.mxu0 0.0
    %157 = vmatprep.subr.mxu0 0.0
    %158 = vmatpush1.msra.mxu0 0.0
    %159 = vmatprep.mubr.f32.mxu0 0.0
    %160 = vmatmul.mubr.f32.gmra.mrb[0].mxu0 %v64
    %v161 = vpop.f32.mrb[0].mxu0
    %v162 = vadd.f32 %v93, %v161
    %v163 = vpop.f32.mrb[0].mxu0
    %164 = vmatprep.mubr.f32.mxu0 0.0
    %165 = vmatmul.mubr.f32.gmra.mrb[0].mxu0 %v65
    %v166 = vpop.f32.mrb[0].mxu0
    %v167 = vadd.f32 %v93, %v166
    %v168 = vpop.f32.mrb[0].mxu0
    %169 = vmatprep.mubr.f32.mxu0 0.0
    %170 = vmatmul.mubr.f32.gmra.mrb[0].mxu0 %v66
    %v171 = vpop.f32.mrb[0].mxu0
    %v172 = vadd.f32 %v93, %v171
    %v173 = vpop.f32.mrb[0].mxu0
    %174 = vmatprep.mubr.f32.mxu0 0.0
    %175 = vmatmul.mubr.f32.gmra.mrb[0].mxu0 %v67
    %v176 = vpop.f32.mrb[0].mxu0
    %v177 = vadd.f32 %v93, %v176
    %v178 = vpop.f32.mrb[0].mxu0
    %179 = vmatprep.mubr.f32.mxu0 0.0
    %180 = vmatmul.mubr.f32.gmra.mrb[0].mxu0 %v68
    %v181 = vpop.f32.mrb[0].mxu0
    %v182 = vadd.f32 %v93, %v181
    %v183 = vpop.f32.mrb[0].mxu0
    %184 = vmatprep.mubr.f32.mxu0 0.0
    %185 = vmatmul.mubr.f32.gmra.mrb[0].mxu0 %v69
    %v186 = vpop.f32.mrb[0].mxu0
    %v187 = vadd.f32 %v93, %v186
    %v188 = vpop.f32.mrb[0].mxu0
    %189 = vmatprep.mubr.f32.mxu0 0.0
    %190 = vmatmul.mubr.f32.gmra.mrb[0].mxu0 %v70
    %v191 = vpop.f32.mrb[0].mxu0
    %v192 = vadd.f32 %v93, %v191
    %v193 = vpop.f32.mrb[0].mxu0
    %194 = vmatprep.mubr.f32.mxu0 0.0
    %195 = vmatmul.mubr.f32.gmra.mrb[0].mxu0 %v71
    %v196 = vpop.f32.mrb[0].mxu0
    %v197 = vadd.f32 %v93, %v196
    %v198 = vpop.f32.mrb[0].mxu0
    %199 = vdwg.mxu0
    %v200 = vcombine.low %v162, %v172
    %v201 = vcombine.high %v162, %v172
    %v203 = vunpack.c.l.s4 1983009808
    %v204 = vunpack.c.0.s8 %v203
    %v205 = vlaneseq
    %v206 = vshrl.u32 %v205, 7
    %v207 = vsub.s32 %v204, %v206
    %v208 = vrot.slane %v200, %v207
    %v210 = vunpack.c.l.s4 1983009808
    %v211 = vunpack.c.0.s8 %v210
    %v212 = vlaneseq
    %v213 = vshrl.u32 %v212, 7
    %v214 = vsub.s32 %v211, %v213
    %v215 = vrot.slane %v201, %v214
    %v216 = vcombine.low %v167, %v177
    %v217 = vcombine.high %v167, %v177
    %v219 = vunpack.c.l.s4 1983009808
    %v220 = vunpack.c.0.s8 %v219
    %v221 = vlaneseq
    %v222 = vshrl.u32 %v221, 7
    %v223 = vsub.s32 %v220, %v222
    %v224 = vrot.slane %v216, %v223
    %v226 = vunpack.c.l.s4 1983009808
    %v227 = vunpack.c.0.s8 %v226
    %v228 = vlaneseq
    %v229 = vshrl.u32 %v228, 7
    %v230 = vsub.s32 %v227, %v229
    %v231 = vrot.slane %v217, %v230
    %v232 = vcombine.low %v182, %v192
    %v233 = vcombine.high %v182, %v192
    %v235 = vunpack.c.l.s4 1983009808
    %v236 = vunpack.c.0.s8 %v235
    %v237 = vlaneseq
    %v238 = vshrl.u32 %v237, 7
    %v239 = vsub.s32 %v236, %v238
    %v240 = vrot.slane %v232, %v239
    %v242 = vunpack.c.l.s4 1983009808
    %v243 = vunpack.c.0.s8 %v242
    %v244 = vlaneseq
    %v245 = vshrl.u32 %v244, 7
    %v246 = vsub.s32 %v243, %v245
    %v247 = vrot.slane %v233, %v246
    %v248 = vcombine.low %v187, %v197
    %v249 = vcombine.high %v187, %v197
    %v251 = vunpack.c.l.s4 1983009808
    %v252 = vunpack.c.0.s8 %v251
    %v253 = vlaneseq
    %v254 = vshrl.u32 %v253, 7
    %v255 = vsub.s32 %v252, %v254
    %v256 = vrot.slane %v248, %v255
    %v258 = vunpack.c.l.s4 1983009808
    %v259 = vunpack.c.0.s8 %v258
    %v260 = vlaneseq
    %v261 = vshrl.u32 %v260, 7
    %v262 = vsub.s32 %v259, %v261
    %v263 = vrot.slane %v249, %v262
    %v264 = vcombine.low %v208, %v224
    %v265 = vcombine.high %v208, %v224
    %v267 = vunpack.c.l.s4 1934713408
    %v268 = vunpack.c.0.s8 %v267
    %v269 = vlaneseq
    %v270 = vshrl.u32 %v269, 7
    %v271 = vsub.s32 %v268, %v270
    %v272 = vrot.slane %v264, %v271
    %v274 = vunpack.c.l.s4 1934713408
    %v275 = vunpack.c.0.s8 %v274
    %v276 = vlaneseq
    %v277 = vshrl.u32 %v276, 7
    %v278 = vsub.s32 %v275, %v277
    %v279 = vrot.slane %v265, %v278
    %v280 = vcombine.low %v215, %v231
    %v281 = vcombine.high %v215, %v231
    %v283 = vunpack.c.l.s4 1934713408
    %v284 = vunpack.c.0.s8 %v283
    %v285 = vlaneseq
    %v286 = vshrl.u32 %v285, 7
    %v287 = vsub.s32 %v284, %v286
    %v288 = vrot.slane %v280, %v287
    %v290 = vunpack.c.l.s4 1934713408
    %v291 = vunpack.c.0.s8 %v290
    %v292 = vlaneseq
    %v293 = vshrl.u32 %v292, 7
    %v294 = vsub.s32 %v291, %v293
    %v295 = vrot.slane %v281, %v294
    %v296 = vcombine.low %v240, %v256
    %v297 = vcombine.high %v240, %v256
    %v299 = vunpack.c.l.s4 1934713408
    %v300 = vunpack.c.0.s8 %v299
    %v301 = vlaneseq
    %v302 = vshrl.u32 %v301, 7
    %v303 = vsub.s32 %v300, %v302
    %v304 = vrot.slane %v296, %v303
    %v306 = vunpack.c.l.s4 1934713408
    %v307 = vunpack.c.0.s8 %v306
    %v308 = vlaneseq
    %v309 = vshrl.u32 %v308, 7
    %v310 = vsub.s32 %v307, %v309
    %v311 = vrot.slane %v297, %v310
    %v312 = vcombine.low %v247, %v263
    %v313 = vcombine.high %v247, %v263
    %v315 = vunpack.c.l.s4 1934713408
    %v316 = vunpack.c.0.s8 %v315
    %v317 = vlaneseq
    %v318 = vshrl.u32 %v317, 7
    %v319 = vsub.s32 %v316, %v318
    %v320 = vrot.slane %v312, %v319
    %v322 = vunpack.c.l.s4 1934713408
    %v323 = vunpack.c.0.s8 %v322
    %v324 = vlaneseq
    %v325 = vshrl.u32 %v324, 7
    %v326 = vsub.s32 %v323, %v325
    %v327 = vrot.slane %v313, %v326
    %v328 = vcombine.low %v272, %v304
    %v329 = vcombine.high %v272, %v304
    %v330 = vcombine.low %v279, %v311
    %v331 = vcombine.high %v279, %v311
    %v332 = vcombine.low %v288, %v320
    %v333 = vcombine.high %v288, %v320
    %v334 = vcombine.low %v295, %v327
    %v335 = vcombine.high %v295, %v327
    %336 = vst [vmem:[#allocation3] sm:$0xff] %v328
    %337 = vst [vmem:[#allocation3 + $0x8] sm:$0xff] %v329
    %338 = vst [vmem:[#allocation3 + $0x10] sm:$0xff] %v330
    %339 = vst [vmem:[#allocation3 + $0x18] sm:$0xff] %v331
    %340 = vst [vmem:[#allocation3 + $0x20] sm:$0xff] %v332
    %341 = vst [vmem:[#allocation3 + $0x28] sm:$0xff] %v333
    %342 = vst [vmem:[#allocation3 + $0x30] sm:$0xff] %v334
    %343 = vst [vmem:[#allocation3 + $0x38] sm:$0xff] %v335
    %v344 = vld [vmem:[#allocation2] sm:$0xff]
    %v345 = vld [vmem:[#allocation9] sm:$0xff]
    %v346 = vld [vmem:[#allocation9 + $0x8] sm:$0xff]
    %v347 = vld [vmem:[#allocation9 + $0x10] sm:$0xff]
    %v348 = vld [vmem:[#allocation9 + $0x18] sm:$0xff]
    %v349 = vld [vmem:[#allocation9 + $0x20] sm:$0xff]
    %v350 = vld [vmem:[#allocation9 + $0x28] sm:$0xff]
    %v351 = vld [vmem:[#allocation9 + $0x30] sm:$0xff]
    %v352 = vld [vmem:[#allocation9 + $0x38] sm:$0xff]
    %v353 = vld [vmem:[#allocation9 + $0x40] sm:$0xff]
    %v354 = vld [vmem:[#allocation9 + $0x48] sm:$0xff]
    %v355 = vld [vmem:[#allocation9 + $0x50] sm:$0xff]
    %v356 = vld [vmem:[#allocation9 + $0x58] sm:$0xff]
    %v357 = vld [vmem:[#allocation9 + $0x60] sm:$0xff]
    %v358 = vld [vmem:[#allocation9 + $0x68] sm:$0xff]
    %v359 = vld [vmem:[#allocation9 + $0x70] sm:$0xff]
    %v360 = vld [vmem:[#allocation9 + $0x78] sm:$0xff]
    %v361 = vld [vmem:[#allocation3] sm:$0xff]
    %362 = vmatprep.subr.mxu0 0.0
    %363 = vmatpush1.msra.mxu0 %v345
    %364 = vmatprep.subr.mxu0 0.0
    %365 = vmatpush1.msra.mxu0 %v346
    %366 = vmatprep.subr.mxu0 0.0
    %367 = vmatpush1.msra.mxu0 %v347
    %368 = vmatprep.subr.mxu0 0.0
    %369 = vmatpush1.msra.mxu0 %v348
    %370 = vmatprep.subr.mxu0 0.0
    %371 = vmatpush1.msra.mxu0 %v349
    %372 = vmatprep.subr.mxu0 0.0
    %373 = vmatpush1.msra.mxu0 %v350
    %374 = vmatprep.subr.mxu0 0.0
    %375 = vmatpush1.msra.mxu0 %v351
    %376 = vmatprep.subr.mxu0 0.0
    %377 = vmatpush1.msra.mxu0 %v352
    %378 = vmatprep.subr.mxu0 0.0
    %379 = vmatpush1.msra.mxu0 %v353
    %380 = vmatprep.subr.mxu0 0.0
    %381 = vmatpush1.msra.mxu0 %v354
    %382 = vmatprep.subr.mxu0 0.0
    %383 = vmatpush1.msra.mxu0 %v355
    %384 = vmatprep.subr.mxu0 0.0
    %385 = vmatpush1.msra.mxu0 %v356
    %386 = vmatprep.subr.mxu0 0.0
    %387 = vmatpush1.msra.mxu0 %v357
    %388 = vmatprep.subr.mxu0 0.0
    %389 = vmatpush1.msra.mxu0 %v358
    %390 = vmatprep.subr.mxu0 0.0
    %391 = vmatpush1.msra.mxu0 %v359
    %392 = vmatprep.subr.mxu0 0.0
    %393 = vmatpush1.msra.mxu0 %v360
    %394 = vmatprep.subr.mxu0 0.0
    %395 = vmatpush1.msra.mxu0 0.0
    %396 = vmatprep.subr.mxu0 0.0
    %397 = vmatpush1.msra.mxu0 0.0
    %398 = vmatprep.subr.mxu0 0.0
    %399 = vmatpush1.msra.mxu0 0.0
    %400 = vmatprep.subr.mxu0 0.0
    %401 = vmatpush1.msra.mxu0 0.0
    %402 = vmatprep.subr.mxu0 0.0
    %403 = vmatpush1.msra.mxu0 0.0
    %404 = vmatprep.subr.mxu0 0.0
    %405 = vmatpush1.msra.mxu0 0.0
    %406 = vmatprep.subr.mxu0 0.0
    %407 = vmatpush1.msra.mxu0 0.0
    %408 = vmatprep.subr.mxu0 0.0
    %409 = vmatpush1.msra.mxu0 0.0
    %410 = vmatprep.subr.mxu0 0.0
    %411 = vmatpush1.msra.mxu0 0.0
    %412 = vmatprep.subr.mxu0 0.0
    %413 = vmatpush1.msra.mxu0 0.0
    %414 = vmatprep.subr.mxu0 0.0
    %415 = vmatpush1.msra.mxu0 0.0
    %416 = vmatprep.subr.mxu0 0.0
    %417 = vmatpush1.msra.mxu0 0.0
    %418 = vmatprep.subr.mxu0 0.0
    %419 = vmatpush1.msra.mxu0 0.0
    %420 = vmatprep.subr.mxu0 0.0
    %421 = vmatpush1.msra.mxu0 0.0
    %422 = vmatprep.subr.mxu0 0.0
    %423 = vmatpush1.msra.mxu0 0.0
    %424 = vmatprep.subr.mxu0 0.0
    %425 = vmatpush1.msra.mxu0 0.0
    %426 = vmatprep.mubr.f32.mxu0 0.0
    %427 = vmatmul.mubr.f32.gmra.mrb[0].mxu0 %v344
    %v428 = vpop.f32.mrb[0].mxu0
    %v429 = vadd.f32 0.0, %v428
    %v430 = vpop.f32.mrb[0].mxu0
    %431 = vdwg.mxu0
    %v432 = vadd.f32 %v361, %v429
    %v433 = vmax.f32 %v432, 0.0
    %434 = vst [vmem:[#allocation3] sm:$0xff] %v433
    %s435 = scalar_lea.vmem [#allocation3], 8
    %v436 = vld [vmem:[%s435] sm:$0xff]
    %437 = vmatprep.subr.mxu0 0.0
    %438 = vmatpush1.msra.mxu0 %v345
    %439 = vmatprep.subr.mxu0 0.0
    %440 = vmatpush1.msra.mxu0 %v346
    %441 = vmatprep.subr.mxu0 0.0
    %442 = vmatpush1.msra.mxu0 %v347
    %443 = vmatprep.subr.mxu0 0.0
    %444 = vmatpush1.msra.mxu0 %v348
    %445 = vmatprep.subr.mxu0 0.0
    %446 = vmatpush1.msra.mxu0 %v349
    %447 = vmatprep.subr.mxu0 0.0
    %448 = vmatpush1.msra.mxu0 %v350
    %449 = vmatprep.subr.mxu0 0.0
    %450 = vmatpush1.msra.mxu0 %v351
    %451 = vmatprep.subr.mxu0 0.0
    %452 = vmatpush1.msra.mxu0 %v352
    %453 = vmatprep.subr.mxu0 0.0
    %454 = vmatpush1.msra.mxu0 %v353
    %455 = vmatprep.subr.mxu0 0.0
    %456 = vmatpush1.msra.mxu0 %v354
    %457 = vmatprep.subr.mxu0 0.0
    %458 = vmatpush1.msra.mxu0 %v355
    %459 = vmatprep.subr.mxu0 0.0
    %460 = vmatpush1.msra.mxu0 %v356
    %461 = vmatprep.subr.mxu0 0.0
    %462 = vmatpush1.msra.mxu0 %v357
    %463 = vmatprep.subr.mxu0 0.0
    %464 = vmatpush1.msra.mxu0 %v358
    %465 = vmatprep.subr.mxu0 0.0
    %466 = vmatpush1.msra.mxu0 %v359
    %467 = vmatprep.subr.mxu0 0.0
    %468 = vmatpush1.msra.mxu0 %v360
    %469 = vmatprep.subr.mxu0 0.0
    %470 = vmatpush1.msra.mxu0 0.0
    %471 = vmatprep.subr.mxu0 0.0
    %472 = vmatpush1.msra.mxu0 0.0
    %473 = vmatprep.subr.mxu0 0.0
    %474 = vmatpush1.msra.mxu0 0.0
    %475 = vmatprep.subr.mxu0 0.0
    %476 = vmatpush1.msra.mxu0 0.0
    %477 = vmatprep.subr.mxu0 0.0
    %478 = vmatpush1.msra.mxu0 0.0
    %479 = vmatprep.subr.mxu0 0.0
    %480 = vmatpush1.msra.mxu0 0.0
    %481 = vmatprep.subr.mxu0 0.0
    %482 = vmatpush1.msra.mxu0 0.0
    %483 = vmatprep.subr.mxu0 0.0
    %484 = vmatpush1.msra.mxu0 0.0
    %485 = vmatprep.subr.mxu0 0.0
    %486 = vmatpush1.msra.mxu0 0.0
    %487 = vmatprep.subr.mxu0 0.0
    %488 = vmatpush1.msra.mxu0 0.0
    %489 = vmatprep.subr.mxu0 0.0
    %490 = vmatpush1.msra.mxu0 0.0
    %491 = vmatprep.subr.mxu0 0.0
    %492 = vmatpush1.msra.mxu0 0.0
    %493 = vmatprep.subr.mxu0 0.0
    %494 = vmatpush1.msra.mxu0 0.0
    %495 = vmatprep.subr.mxu0 0.0
    %496 = vmatpush1.msra.mxu0 0.0
    %497 = vmatprep.subr.mxu0 0.0
    %498 = vmatpush1.msra.mxu0 0.0
    %499 = vmatprep.subr.mxu0 0.0
    %500 = vmatpush1.msra.mxu0 0.0
    %501 = vmatprep.mubr.f32.mxu0 0.0
    %502 = vmatmul.mubr.f32.gmra.mrb[0].mxu0 %v433
    %v503 = vpop.f32.mrb[0].mxu0
    %v504 = vadd.f32 0.0, %v503
    %v505 = vpop.f32.mrb[0].mxu0
    %506 = vdwg.mxu0
    %v507 = vadd.f32 %v436, %v504
    %v508 = vmax.f32 %v507, 0.0
    %509 = vst [vmem:[%s435] sm:$0xff] %v508
    %s510 = scalar_lea.vmem [#allocation3], 16
    %v511 = vld [vmem:[%s510] sm:$0xff]
    %512 = vmatprep.subr.mxu0 0.0
    %513 = vmatpush1.msra.mxu0 %v345
    %514 = vmatprep.subr.mxu0 0.0
    %515 = vmatpush1.msra.mxu0 %v346
    %516 = vmatprep.subr.mxu0 0.0
    %517 = vmatpush1.msra.mxu0 %v347
    %518 = vmatprep.subr.mxu0 0.0
    %519 = vmatpush1.msra.mxu0 %v348
    %520 = vmatprep.subr.mxu0 0.0
    %521 = vmatpush1.msra.mxu0 %v349
    %522 = vmatprep.subr.mxu0 0.0
    %523 = vmatpush1.msra.mxu0 %v350
    %524 = vmatprep.subr.mxu0 0.0
    %525 = vmatpush1.msra.mxu0 %v351
    %526 = vmatprep.subr.mxu0 0.0
    %527 = vmatpush1.msra.mxu0 %v352
    %528 = vmatprep.subr.mxu0 0.0
    %529 = vmatpush1.msra.mxu0 %v353
    %530 = vmatprep.subr.mxu0 0.0
    %531 = vmatpush1.msra.mxu0 %v354
    %532 = vmatprep.subr.mxu0 0.0
    %533 = vmatpush1.msra.mxu0 %v355
    %534 = vmatprep.subr.mxu0 0.0
    %535 = vmatpush1.msra.mxu0 %v356
    %536 = vmatprep.subr.mxu0 0.0
    %537 = vmatpush1.msra.mxu0 %v357
    %538 = vmatprep.subr.mxu0 0.0
    %539 = vmatpush1.msra.mxu0 %v358
    %540 = vmatprep.subr.mxu0 0.0
    %541 = vmatpush1.msra.mxu0 %v359
    %542 = vmatprep.subr.mxu0 0.0
    %543 = vmatpush1.msra.mxu0 %v360
    %544 = vmatprep.subr.mxu0 0.0
    %545 = vmatpush1.msra.mxu0 0.0
    %546 = vmatprep.subr.mxu0 0.0
    %547 = vmatpush1.msra.mxu0 0.0
    %548 = vmatprep.subr.mxu0 0.0
    %549 = vmatpush1.msra.mxu0 0.0
    %550 = vmatprep.subr.mxu0 0.0
    %551 = vmatpush1.msra.mxu0 0.0
    %552 = vmatprep.subr.mxu0 0.0
    %553 = vmatpush1.msra.mxu0 0.0
    %554 = vmatprep.subr.mxu0 0.0
    %555 = vmatpush1.msra.mxu0 0.0
    %556 = vmatprep.subr.mxu0 0.0
    %557 = vmatpush1.msra.mxu0 0.0
    %558 = vmatprep.subr.mxu0 0.0
    %559 = vmatpush1.msra.mxu0 0.0
    %560 = vmatprep.subr.mxu0 0.0
    %561 = vmatpush1.msra.mxu0 0.0
    %562 = vmatprep.subr.mxu0 0.0
    %563 = vmatpush1.msra.mxu0 0.0
    %564 = vmatprep.subr.mxu0 0.0
    %565 = vmatpush1.msra.mxu0 0.0
    %566 = vmatprep.subr.mxu0 0.0
    %567 = vmatpush1.msra.mxu0 0.0
    %568 = vmatprep.subr.mxu0 0.0
    %569 = vmatpush1.msra.mxu0 0.0
    %570 = vmatprep.subr.mxu0 0.0
    %571 = vmatpush1.msra.mxu0 0.0
    %572 = vmatprep.subr.mxu0 0.0
    %573 = vmatpush1.msra.mxu0 0.0
    %574 = vmatprep.subr.mxu0 0.0
    %575 = vmatpush1.msra.mxu0 0.0
    %576 = vmatprep.mubr.f32.mxu0 0.0
    %577 = vmatmul.mubr.f32.gmra.mrb[0].mxu0 %v508
    %v578 = vpop.f32.mrb[0].mxu0
    %v579 = vadd.f32 0.0, %v578
    %v580 = vpop.f32.mrb[0].mxu0
    %581 = vdwg.mxu0
    %v582 = vadd.f32 %v511, %v579
    %v583 = vmax.f32 %v582, 0.0
    %584 = vst [vmem:[%s510] sm:$0xff] %v583
    %s585 = scalar_lea.vmem [#allocation3], 24
    %v586 = vld [vmem:[%s585] sm:$0xff]
    %587 = vmatprep.subr.mxu0 0.0
    %588 = vmatpush1.msra.mxu0 %v345
    %589 = vmatprep.subr.mxu0 0.0
    %590 = vmatpush1.msra.mxu0 %v346
    %591 = vmatprep.subr.mxu0 0.0
    %592 = vmatpush1.msra.mxu0 %v347
    %593 = vmatprep.subr.mxu0 0.0
    %594 = vmatpush1.msra.mxu0 %v348
    %595 = vmatprep.subr.mxu0 0.0
    %596 = vmatpush1.msra.mxu0 %v349
    %597 = vmatprep.subr.mxu0 0.0
    %598 = vmatpush1.msra.mxu0 %v350
    %599 = vmatprep.subr.mxu0 0.0
    %600 = vmatpush1.msra.mxu0 %v351
    %601 = vmatprep.subr.mxu0 0.0
    %602 = vmatpush1.msra.mxu0 %v352
    %603 = vmatprep.subr.mxu0 0.0
    %604 = vmatpush1.msra.mxu0 %v353
    %605 = vmatprep.subr.mxu0 0.0
    %606 = vmatpush1.msra.mxu0 %v354
    %607 = vmatprep.subr.mxu0 0.0
    %608 = vmatpush1.msra.mxu0 %v355
    %609 = vmatprep.subr.mxu0 0.0
    %610 = vmatpush1.msra.mxu0 %v356
    %611 = vmatprep.subr.mxu0 0.0
    %612 = vmatpush1.msra.mxu0 %v357
    %613 = vmatprep.subr.mxu0 0.0
    %614 = vmatpush1.msra.mxu0 %v358
    %615 = vmatprep.subr.mxu0 0.0
    %616 = vmatpush1.msra.mxu0 %v359
    %617 = vmatprep.subr.mxu0 0.0
    %618 = vmatpush1.msra.mxu0 %v360
    %619 = vmatprep.subr.mxu0 0.0
    %620 = vmatpush1.msra.mxu0 0.0
    %621 = vmatprep.subr.mxu0 0.0
    %622 = vmatpush1.msra.mxu0 0.0
    %623 = vmatprep.subr.mxu0 0.0
    %624 = vmatpush1.msra.mxu0 0.0
    %625 = vmatprep.subr.mxu0 0.0
    %626 = vmatpush1.msra.mxu0 0.0
    %627 = vmatprep.subr.mxu0 0.0
    %628 = vmatpush1.msra.mxu0 0.0
    %629 = vmatprep.subr.mxu0 0.0
    %630 = vmatpush1.msra.mxu0 0.0
    %631 = vmatprep.subr.mxu0 0.0
    %632 = vmatpush1.msra.mxu0 0.0
    %633 = vmatprep.subr.mxu0 0.0
    %634 = vmatpush1.msra.mxu0 0.0
    %635 = vmatprep.subr.mxu0 0.0
    %636 = vmatpush1.msra.mxu0 0.0
    %637 = vmatprep.subr.mxu0 0.0
    %638 = vmatpush1.msra.mxu0 0.0
    %639 = vmatprep.subr.mxu0 0.0
    %640 = vmatpush1.msra.mxu0 0.0
    %641 = vmatprep.subr.mxu0 0.0
    %642 = vmatpush1.msra.mxu0 0.0
    %643 = vmatprep.subr.mxu0 0.0
    %644 = vmatpush1.msra.mxu0 0.0
    %645 = vmatprep.subr.mxu0 0.0
    %646 = vmatpush1.msra.mxu0 0.0
    %647 = vmatprep.subr.mxu0 0.0
    %648 = vmatpush1.msra.mxu0 0.0
    %649 = vmatprep.subr.mxu0 0.0
    %650 = vmatpush1.msra.mxu0 0.0
    %651 = vmatprep.mubr.f32.mxu0 0.0
    %652 = vmatmul.mubr.f32.gmra.mrb[0].mxu0 %v583
    %v653 = vpop.f32.mrb[0].mxu0
    %v654 = vadd.f32 0.0, %v653
    %v655 = vpop.f32.mrb[0].mxu0
    %656 = vdwg.mxu0
    %v657 = vadd.f32 %v586, %v654
    %v658 = vmax.f32 %v657, 0.0
    %659 = vst [vmem:[%s585] sm:$0xff] %v658
    %s660 = scalar_lea.vmem [#allocation3], 32
    %v661 = vld [vmem:[%s660] sm:$0xff]
    %662 = vmatprep.subr.mxu0 0.0
    %663 = vmatpush1.msra.mxu0 %v345
    %664 = vmatprep.subr.mxu0 0.0
    %665 = vmatpush1.msra.mxu0 %v346
    %666 = vmatprep.subr.mxu0 0.0
    %667 = vmatpush1.msra.mxu0 %v347
    %668 = vmatprep.subr.mxu0 0.0
    %669 = vmatpush1.msra.mxu0 %v348
    %670 = vmatprep.subr.mxu0 0.0
    %671 = vmatpush1.msra.mxu0 %v349
    %672 = vmatprep.subr.mxu0 0.0
    %673 = vmatpush1.msra.mxu0 %v350
    %674 = vmatprep.subr.mxu0 0.0
    %675 = vmatpush1.msra.mxu0 %v351
    %676 = vmatprep.subr.mxu0 0.0
    %677 = vmatpush1.msra.mxu0 %v352
    %678 = vmatprep.subr.mxu0 0.0
    %679 = vmatpush1.msra.mxu0 %v353
    %680 = vmatprep.subr.mxu0 0.0
    %681 = vmatpush1.msra.mxu0 %v354
    %682 = vmatprep.subr.mxu0 0.0
    %683 = vmatpush1.msra.mxu0 %v355
    %684 = vmatprep.subr.mxu0 0.0
    %685 = vmatpush1.msra.mxu0 %v356
    %686 = vmatprep.subr.mxu0 0.0
    %687 = vmatpush1.msra.mxu0 %v357
    %688 = vmatprep.subr.mxu0 0.0
    %689 = vmatpush1.msra.mxu0 %v358
    %690 = vmatprep.subr.mxu0 0.0
    %691 = vmatpush1.msra.mxu0 %v359
    %692 = vmatprep.subr.mxu0 0.0
    %693 = vmatpush1.msra.mxu0 %v360
    %694 = vmatprep.subr.mxu0 0.0
    %695 = vmatpush1.msra.mxu0 0.0
    %696 = vmatprep.subr.mxu0 0.0
    %697 = vmatpush1.msra.mxu0 0.0
    %698 = vmatprep.subr.mxu0 0.0
    %699 = vmatpush1.msra.mxu0 0.0
    %700 = vmatprep.subr.mxu0 0.0
    %701 = vmatpush1.msra.mxu0 0.0
    %702 = vmatprep.subr.mxu0 0.0
    %703 = vmatpush1.msra.mxu0 0.0
    %704 = vmatprep.subr.mxu0 0.0
    %705 = vmatpush1.msra.mxu0 0.0
    %706 = vmatprep.subr.mxu0 0.0
    %707 = vmatpush1.msra.mxu0 0.0
    %708 = vmatprep.subr.mxu0 0.0
    %709 = vmatpush1.msra.mxu0 0.0
    %710 = vmatprep.subr.mxu0 0.0
    %711 = vmatpush1.msra.mxu0 0.0
    %712 = vmatprep.subr.mxu0 0.0
    %713 = vmatpush1.msra.mxu0 0.0
    %714 = vmatprep.subr.mxu0 0.0
    %715 = vmatpush1.msra.mxu0 0.0
    %716 = vmatprep.subr.mxu0 0.0
    %717 = vmatpush1.msra.mxu0 0.0
    %718 = vmatprep.subr.mxu0 0.0
    %719 = vmatpush1.msra.mxu0 0.0
    %720 = vmatprep.subr.mxu0 0.0
    %721 = vmatpush1.msra.mxu0 0.0
    %722 = vmatprep.subr.mxu0 0.0
    %723 = vmatpush1.msra.mxu0 0.0
    %724 = vmatprep.subr.mxu0 0.0
    %725 = vmatpush1.msra.mxu0 0.0
    %726 = vmatprep.mubr.f32.mxu0 0.0
    %727 = vmatmul.mubr.f32.gmra.mrb[0].mxu0 %v658
    %v728 = vpop.f32.mrb[0].mxu0
    %v729 = vadd.f32 0.0, %v728
    %v730 = vpop.f32.mrb[0].mxu0
    %731 = vdwg.mxu0
    %v732 = vadd.f32 %v661, %v729
    %v733 = vmax.f32 %v732, 0.0
    %734 = vst [vmem:[%s660] sm:$0xff] %v733
    %s735 = scalar_lea.vmem [#allocation3], 40
    %v736 = vld [vmem:[%s735] sm:$0xff]
    %737 = vmatprep.subr.mxu0 0.0
    %738 = vmatpush1.msra.mxu0 %v345
    %739 = vmatprep.subr.mxu0 0.0
    %740 = vmatpush1.msra.mxu0 %v346
    %741 = vmatprep.subr.mxu0 0.0
    %742 = vmatpush1.msra.mxu0 %v347
    %743 = vmatprep.subr.mxu0 0.0
    %744 = vmatpush1.msra.mxu0 %v348
    %745 = vmatprep.subr.mxu0 0.0
    %746 = vmatpush1.msra.mxu0 %v349
    %747 = vmatprep.subr.mxu0 0.0
    %748 = vmatpush1.msra.mxu0 %v350
    %749 = vmatprep.subr.mxu0 0.0
    %750 = vmatpush1.msra.mxu0 %v351
    %751 = vmatprep.subr.mxu0 0.0
    %752 = vmatpush1.msra.mxu0 %v352
    %753 = vmatprep.subr.mxu0 0.0
    %754 = vmatpush1.msra.mxu0 %v353
    %755 = vmatprep.subr.mxu0 0.0
    %756 = vmatpush1.msra.mxu0 %v354
    %757 = vmatprep.subr.mxu0 0.0
    %758 = vmatpush1.msra.mxu0 %v355
    %759 = vmatprep.subr.mxu0 0.0
    %760 = vmatpush1.msra.mxu0 %v356
    %761 = vmatprep.subr.mxu0 0.0
    %762 = vmatpush1.msra.mxu0 %v357
    %763 = vmatprep.subr.mxu0 0.0
    %764 = vmatpush1.msra.mxu0 %v358
    %765 = vmatprep.subr.mxu0 0.0
    %766 = vmatpush1.msra.mxu0 %v359
    %767 = vmatprep.subr.mxu0 0.0
    %768 = vmatpush1.msra.mxu0 %v360
    %769 = vmatprep.subr.mxu0 0.0
    %770 = vmatpush1.msra.mxu0 0.0
    %771 = vmatprep.subr.mxu0 0.0
    %772 = vmatpush1.msra.mxu0 0.0
    %773 = vmatprep.subr.mxu0 0.0
    %774 = vmatpush1.msra.mxu0 0.0
    %775 = vmatprep.subr.mxu0 0.0
    %776 = vmatpush1.msra.mxu0 0.0
    %777 = vmatprep.subr.mxu0 0.0
    %778 = vmatpush1.msra.mxu0 0.0
    %779 = vmatprep.subr.mxu0 0.0
    %780 = vmatpush1.msra.mxu0 0.0
    %781 = vmatprep.subr.mxu0 0.0
    %782 = vmatpush1.msra.mxu0 0.0
    %783 = vmatprep.subr.mxu0 0.0
    %784 = vmatpush1.msra.mxu0 0.0
    %785 = vmatprep.subr.mxu0 0.0
    %786 = vmatpush1.msra.mxu0 0.0
    %787 = vmatprep.subr.mxu0 0.0
    %788 = vmatpush1.msra.mxu0 0.0
    %789 = vmatprep.subr.mxu0 0.0
    %790 = vmatpush1.msra.mxu0 0.0
    %791 = vmatprep.subr.mxu0 0.0
    %792 = vmatpush1.msra.mxu0 0.0
    %793 = vmatprep.subr.mxu0 0.0
    %794 = vmatpush1.msra.mxu0 0.0
    %795 = vmatprep.subr.mxu0 0.0
    %796 = vmatpush1.msra.mxu0 0.0
    %797 = vmatprep.subr.mxu0 0.0
    %798 = vmatpush1.msra.mxu0 0.0
    %799 = vmatprep.subr.mxu0 0.0
    %800 = vmatpush1.msra.mxu0 0.0
    %801 = vmatprep.mubr.f32.mxu0 0.0
    %802 = vmatmul.mubr.f32.gmra.mrb[0].mxu0 %v733
    %v803 = vpop.f32.mrb[0].mxu0
    %v804 = vadd.f32 0.0, %v803
    %v805 = vpop.f32.mrb[0].mxu0
    %806 = vdwg.mxu0
    %v807 = vadd.f32 %v736, %v804
    %v808 = vmax.f32 %v807, 0.0
    %809 = vst [vmem:[%s735] sm:$0xff] %v808
    %s810 = scalar_lea.vmem [#allocation3], 48
    %v811 = vld [vmem:[%s810] sm:$0xff]
    %812 = vmatprep.subr.mxu0 0.0
    %813 = vmatpush1.msra.mxu0 %v345
    %814 = vmatprep.subr.mxu0 0.0
    %815 = vmatpush1.msra.mxu0 %v346
    %816 = vmatprep.subr.mxu0 0.0
    %817 = vmatpush1.msra.mxu0 %v347
    %818 = vmatprep.subr.mxu0 0.0
    %819 = vmatpush1.msra.mxu0 %v348
    %820 = vmatprep.subr.mxu0 0.0
    %821 = vmatpush1.msra.mxu0 %v349
    %822 = vmatprep.subr.mxu0 0.0
    %823 = vmatpush1.msra.mxu0 %v350
    %824 = vmatprep.subr.mxu0 0.0
    %825 = vmatpush1.msra.mxu0 %v351
    %826 = vmatprep.subr.mxu0 0.0
    %827 = vmatpush1.msra.mxu0 %v352
    %828 = vmatprep.subr.mxu0 0.0
    %829 = vmatpush1.msra.mxu0 %v353
    %830 = vmatprep.subr.mxu0 0.0
    %831 = vmatpush1.msra.mxu0 %v354
    %832 = vmatprep.subr.mxu0 0.0
    %833 = vmatpush1.msra.mxu0 %v355
    %834 = vmatprep.subr.mxu0 0.0
    %835 = vmatpush1.msra.mxu0 %v356
    %836 = vmatprep.subr.mxu0 0.0
    %837 = vmatpush1.msra.mxu0 %v357
    %838 = vmatprep.subr.mxu0 0.0
    %839 = vmatpush1.msra.mxu0 %v358
    %840 = vmatprep.subr.mxu0 0.0
    %841 = vmatpush1.msra.mxu0 %v359
    %842 = vmatprep.subr.mxu0 0.0
    %843 = vmatpush1.msra.mxu0 %v360
    %844 = vmatprep.subr.mxu0 0.0
    %845 = vmatpush1.msra.mxu0 0.0
    %846 = vmatprep.subr.mxu0 0.0
    %847 = vmatpush1.msra.mxu0 0.0
    %848 = vmatprep.subr.mxu0 0.0
    %849 = vmatpush1.msra.mxu0 0.0
    %850 = vmatprep.subr.mxu0 0.0
    %851 = vmatpush1.msra.mxu0 0.0
    %852 = vmatprep.subr.mxu0 0.0
    %853 = vmatpush1.msra.mxu0 0.0
    %854 = vmatprep.subr.mxu0 0.0
    %855 = vmatpush1.msra.mxu0 0.0
    %856 = vmatprep.subr.mxu0 0.0
    %857 = vmatpush1.msra.mxu0 0.0
    %858 = vmatprep.subr.mxu0 0.0
    %859 = vmatpush1.msra.mxu0 0.0
    %860 = vmatprep.subr.mxu0 0.0
    %861 = vmatpush1.msra.mxu0 0.0
    %862 = vmatprep.subr.mxu0 0.0
    %863 = vmatpush1.msra.mxu0 0.0
    %864 = vmatprep.subr.mxu0 0.0
    %865 = vmatpush1.msra.mxu0 0.0
    %866 = vmatprep.subr.mxu0 0.0
    %867 = vmatpush1.msra.mxu0 0.0
    %868 = vmatprep.subr.mxu0 0.0
    %869 = vmatpush1.msra.mxu0 0.0
    %870 = vmatprep.subr.mxu0 0.0
    %871 = vmatpush1.msra.mxu0 0.0
    %872 = vmatprep.subr.mxu0 0.0
    %873 = vmatpush1.msra.mxu0 0.0
    %874 = vmatprep.subr.mxu0 0.0
    %875 = vmatpush1.msra.mxu0 0.0
    %876 = vmatprep.mubr.f32.mxu0 0.0
    %877 = vmatmul.mubr.f32.gmra.mrb[0].mxu0 %v808
    %v878 = vpop.f32.mrb[0].mxu0
    %v879 = vadd.f32 0.0, %v878
    %v880 = vpop.f32.mrb[0].mxu0
    %881 = vdwg.mxu0
    %v882 = vadd.f32 %v811, %v879
    %v883 = vmax.f32 %v882, 0.0
    %884 = vst [vmem:[%s810] sm:$0xff] %v883
    %s885 = scalar_lea.vmem [#allocation3], 56
    %v886 = vld [vmem:[%s885] sm:$0xff]
    %887 = vmatprep.subr.mxu0 0.0
    %888 = vmatpush1.msra.mxu0 %v345
    %889 = vmatprep.subr.mxu0 0.0
    %890 = vmatpush1.msra.mxu0 %v346
    %891 = vmatprep.subr.mxu0 0.0
    %892 = vmatpush1.msra.mxu0 %v347
    %893 = vmatprep.subr.mxu0 0.0
    %894 = vmatpush1.msra.mxu0 %v348
    %895 = vmatprep.subr.mxu0 0.0
    %896 = vmatpush1.msra.mxu0 %v349
    %897 = vmatprep.subr.mxu0 0.0
    %898 = vmatpush1.msra.mxu0 %v350
    %899 = vmatprep.subr.mxu0 0.0
    %900 = vmatpush1.msra.mxu0 %v351
    %901 = vmatprep.subr.mxu0 0.0
    %902 = vmatpush1.msra.mxu0 %v352
    %903 = vmatprep.subr.mxu0 0.0
    %904 = vmatpush1.msra.mxu0 %v353
    %905 = vmatprep.subr.mxu0 0.0
    %906 = vmatpush1.msra.mxu0 %v354
    %907 = vmatprep.subr.mxu0 0.0
    %908 = vmatpush1.msra.mxu0 %v355
    %909 = vmatprep.subr.mxu0 0.0
    %910 = vmatpush1.msra.mxu0 %v356
    %911 = vmatprep.subr.mxu0 0.0
    %912 = vmatpush1.msra.mxu0 %v357
    %913 = vmatprep.subr.mxu0 0.0
    %914 = vmatpush1.msra.mxu0 %v358
    %915 = vmatprep.subr.mxu0 0.0
    %916 = vmatpush1.msra.mxu0 %v359
    %917 = vmatprep.subr.mxu0 0.0
    %918 = vmatpush1.msra.mxu0 %v360
    %919 = vmatprep.subr.mxu0 0.0
    %920 = vmatpush1.msra.mxu0 0.0
    %921 = vmatprep.subr.mxu0 0.0
    %922 = vmatpush1.msra.mxu0 0.0
    %923 = vmatprep.subr.mxu0 0.0
    %924 = vmatpush1.msra.mxu0 0.0
    %925 = vmatprep.subr.mxu0 0.0
    %926 = vmatpush1.msra.mxu0 0.0
    %927 = vmatprep.subr.mxu0 0.0
    %928 = vmatpush1.msra.mxu0 0.0
    %929 = vmatprep.subr.mxu0 0.0
    %930 = vmatpush1.msra.mxu0 0.0
    %931 = vmatprep.subr.mxu0 0.0
    %932 = vmatpush1.msra.mxu0 0.0
    %933 = vmatprep.subr.mxu0 0.0
    %934 = vmatpush1.msra.mxu0 0.0
    %935 = vmatprep.subr.mxu0 0.0
    %936 = vmatpush1.msra.mxu0 0.0
    %937 = vmatprep.subr.mxu0 0.0
    %938 = vmatpush1.msra.mxu0 0.0
    %939 = vmatprep.subr.mxu0 0.0
    %940 = vmatpush1.msra.mxu0 0.0
    %941 = vmatprep.subr.mxu0 0.0
    %942 = vmatpush1.msra.mxu0 0.0
    %943 = vmatprep.subr.mxu0 0.0
    %944 = vmatpush1.msra.mxu0 0.0
    %945 = vmatprep.subr.mxu0 0.0
    %946 = vmatpush1.msra.mxu0 0.0
    %947 = vmatprep.subr.mxu0 0.0
    %948 = vmatpush1.msra.mxu0 0.0
    %949 = vmatprep.subr.mxu0 0.0
    %950 = vmatpush1.msra.mxu0 0.0
    %951 = vmatprep.mubr.f32.mxu0 0.0
    %952 = vmatmul.mubr.f32.gmra.mrb[0].mxu0 %v883
    %v953 = vpop.f32.mrb[0].mxu0
    %v954 = vadd.f32 0.0, %v953
    %v955 = vpop.f32.mrb[0].mxu0
    %956 = vdwg.mxu0
    %v957 = vadd.f32 %v886, %v954
    %v958 = vmax.f32 %v957, 0.0
    %959 = vst [vmem:[%s885] sm:$0xff] %v958
    %960 = vst [vmem:[#allocation2] sm:$0xff] %v958
    %v961 = vld [vmem:[#allocation3] sm:$0xff]
    %v962 = vld [vmem:[#allocation3 + $0x8] sm:$0xff]
    %v963 = vld [vmem:[#allocation3 + $0x10] sm:$0xff]
    %v964 = vld [vmem:[#allocation3 + $0x18] sm:$0xff]
    %v965 = vld [vmem:[#allocation3 + $0x20] sm:$0xff]
    %v966 = vld [vmem:[#allocation3 + $0x28] sm:$0xff]
    %v967 = vld [vmem:[#allocation3 + $0x30] sm:$0xff]
    %v968 = vld [vmem:[#allocation3 + $0x38] sm:$0xff]
    %v969 = vcombine.low %v961, %v963
    %v970 = vcombine.high %v961, %v963
    %v972 = vunpack.c.l.s4 1983009808
    %v973 = vunpack.c.0.s8 %v972
    %v974 = vlaneseq
    %v975 = vshrl.u32 %v974, 7
    %v976 = vsub.s32 %v973, %v975
    %v977 = vrot.slane %v969, %v976
    %v979 = vunpack.c.l.s4 1983009808
    %v980 = vunpack.c.0.s8 %v979
    %v981 = vlaneseq
    %v982 = vshrl.u32 %v981, 7
    %v983 = vsub.s32 %v980, %v982
    %v984 = vrot.slane %v970, %v983
    %v985 = vcombine.low %v962, %v964
    %v986 = vcombine.high %v962, %v964
    %v988 = vunpack.c.l.s4 1983009808
    %v989 = vunpack.c.0.s8 %v988
    %v990 = vlaneseq
    %v991 = vshrl.u32 %v990, 7
    %v992 = vsub.s32 %v989, %v991
    %v993 = vrot.slane %v985, %v992
    %v995 = vunpack.c.l.s4 1983009808
    %v996 = vunpack.c.0.s8 %v995
    %v997 = vlaneseq
    %v998 = vshrl.u32 %v997, 7
    %v999 = vsub.s32 %v996, %v998
    %v1000 = vrot.slane %v986, %v999
    %v1001 = vcombine.low %v965, %v967
    %v1002 = vcombine.high %v965, %v967
    %v1004 = vunpack.c.l.s4 1983009808
    %v1005 = vunpack.c.0.s8 %v1004
    %v1006 = vlaneseq
    %v1007 = vshrl.u32 %v1006, 7
    %v1008 = vsub.s32 %v1005, %v1007
    %v1009 = vrot.slane %v1001, %v1008
    %v1011 = vunpack.c.l.s4 1983009808
    %v1012 = vunpack.c.0.s8 %v1011
    %v1013 = vlaneseq
    %v1014 = vshrl.u32 %v1013, 7
    %v1015 = vsub.s32 %v1012, %v1014
    %v1016 = vrot.slane %v1002, %v1015
    %v1017 = vcombine.low %v966, %v968
    %v1018 = vcombine.high %v966, %v968
    %v1020 = vunpack.c.l.s4 1983009808
    %v1021 = vunpack.c.0.s8 %v1020
    %v1022 = vlaneseq
    %v1023 = vshrl.u32 %v1022, 7
    %v1024 = vsub.s32 %v1021, %v1023
    %v1025 = vrot.slane %v1017, %v1024
    %v1027 = vunpack.c.l.s4 1983009808
    %v1028 = vunpack.c.0.s8 %v1027
    %v1029 = vlaneseq
    %v1030 = vshrl.u32 %v1029, 7
    %v1031 = vsub.s32 %v1028, %v1030
    %v1032 = vrot.slane %v1018, %v1031
    %v1033 = vcombine.low %v977, %v993
    %v1034 = vcombine.high %v977, %v993
    %v1036 = vunpack.c.l.s4 1934713408
    %v1037 = vunpack.c.0.s8 %v1036
    %v1038 = vlaneseq
    %v1039 = vshrl.u32 %v1038, 7
    %v1040 = vsub.s32 %v1037, %v1039
    %v1041 = vrot.slane %v1033, %v1040
    %v1043 = vunpack.c.l.s4 1934713408
    %v1044 = vunpack.c.0.s8 %v1043
    %v1045 = vlaneseq
    %v1046 = vshrl.u32 %v1045, 7
    %v1047 = vsub.s32 %v1044, %v1046
    %v1048 = vrot.slane %v1034, %v1047
    %v1049 = vcombine.low %v984, %v1000
    %v1050 = vcombine.high %v984, %v1000
    %v1052 = vunpack.c.l.s4 1934713408
    %v1053 = vunpack.c.0.s8 %v1052
    %v1054 = vlaneseq
    %v1055 = vshrl.u32 %v1054, 7
    %v1056 = vsub.s32 %v1053, %v1055
    %v1057 = vrot.slane %v1049, %v1056
    %v1059 = vunpack.c.l.s4 1934713408
    %v1060 = vunpack.c.0.s8 %v1059
    %v1061 = vlaneseq
    %v1062 = vshrl.u32 %v1061, 7
    %v1063 = vsub.s32 %v1060, %v1062
    %v1064 = vrot.slane %v1050, %v1063
    %v1065 = vcombine.low %v1009, %v1025
    %v1066 = vcombine.high %v1009, %v1025
    %v1068 = vunpack.c.l.s4 1934713408
    %v1069 = vunpack.c.0.s8 %v1068
    %v1070 = vlaneseq
    %v1071 = vshrl.u32 %v1070, 7
    %v1072 = vsub.s32 %v1069, %v1071
    %v1073 = vrot.slane %v1065, %v1072
    %v1075 = vunpack.c.l.s4 1934713408
    %v1076 = vunpack.c.0.s8 %v1075
    %v1077 = vlaneseq
    %v1078 = vshrl.u32 %v1077, 7
    %v1079 = vsub.s32 %v1076, %v1078
    %v1080 = vrot.slane %v1066, %v1079
    %v1081 = vcombine.low %v1016, %v1032
    %v1082 = vcombine.high %v1016, %v1032
    %v1084 = vunpack.c.l.s4 1934713408
    %v1085 = vunpack.c.0.s8 %v1084
    %v1086 = vlaneseq
    %v1087 = vshrl.u32 %v1086, 7
    %v1088 = vsub.s32 %v1085, %v1087
    %v1089 = vrot.slane %v1081, %v1088
    %v1091 = vunpack.c.l.s4 1934713408
    %v1092 = vunpack.c.0.s8 %v1091
    %v1093 = vlaneseq
    %v1094 = vshrl.u32 %v1093, 7
    %v1095 = vsub.s32 %v1092, %v1094
    %v1096 = vrot.slane %v1082, %v1095
    %v1097 = vcombine.low %v1041, %v1073
    %v1098 = vcombine.high %v1041, %v1073
    %v1099 = vcombine.low %v1048, %v1080
    %v1100 = vcombine.high %v1048, %v1080
    %v1101 = vcombine.low %v1057, %v1089
    %v1102 = vcombine.high %v1057, %v1089
    %v1103 = vcombine.low %v1064, %v1096
    %v1104 = vcombine.high %v1064, %v1096
    %1105 = vst [vmem:[#allocation10] sm:$0xff] %v1097
    %1106 = vst [vmem:[#allocation10 + $0x8] sm:$0xff] %v1098
    %1107 = vst [vmem:[#allocation10 + $0x10] sm:$0xff] %v1099
    %1108 = vst [vmem:[#allocation10 + $0x18] sm:$0xff] %v1100
    %1109 = vst [vmem:[#allocation10 + $0x20] sm:$0xff] %v1101
    %1110 = vst [vmem:[#allocation10 + $0x28] sm:$0xff] %v1102
    %1111 = vst [vmem:[#allocation10 + $0x30] sm:$0xff] %v1103
    %1112 = vst [vmem:[#allocation10 + $0x38] sm:$0xff] %v1104
    // Predicated region
    $region34: #{tpu_custom_call.1} parent=1 // pred_check
      _
    $region35: #{tpu_custom_call.1} parent=1 // pred_check_branch
      %1114 = sbr.rel (0) target = $region37
    $region36: #{tpu_custom_call.1} parent=1 // pred_region
      %s1116 = ssub.s32 1024, 1024
      %1117 = vsyncadd [#allocation6], %s1116
      %s1118 = sshll.u32 [#allocation10], 4
      %s1119 = int_to_ptr.vmem [resolvable:$true] %s1118
      %1124 = dma.vmem_to_hbm [thread:$0]  %s1119, 1024, %s4, [#allocation6], 128, 128, 8
    $region37: #{tpu_custom_call.1} parent=1 // pred_fallthru
      _
    // Predicated region
    $region38: #{tpu_custom_call.1} parent=1 // pred_check
      _
    $region39: #{tpu_custom_call.1} parent=1 // pred_check_branch
      %1126 = sbr.rel (0) target = $region41
    $region40: #{tpu_custom_call.1} parent=1 // pred_region
      %1127 = dma.done [#allocation6], 1024
    $region41: #{tpu_custom_call.1} parent=1 // pred_fallthru
      _
    %1128 = vsyncpa [#allocation5], 1
    %1129 = vsyncpa [#allocation8], 1
    %1130 = vsyncpa [#allocation6], 1

</llo_original>
